<compile_context>
chip_gen: v7x
topology: tpu7x:2x2x1
jax: 0.10.0
libtpu: 0.0.40
codegen_flags: <defaults>
</compile_context>

<pallas_src>
import jax
import jax.numpy as jnp
from jax.experimental import pallas as pl
from jax.experimental.pallas import tpu as pltpu


def _fcloc_kernel(x_ref, w1_ref, b1_ref, w2_ref, b2_ref, out_ref):
    # h = relu(x @ W1^T + b1)  -- MXU matmul, f32 accumulate.
    h = jnp.dot(x_ref[...], w1_ref[...], preferred_element_type=jnp.float32) + b1_ref[...]
    h = jnp.maximum(h, 0.0)
    # Folded second linear + theta assembly: (TB, 6) = [cos, sin, 0, -sin, cos, 0].
    o = jnp.dot(h, w2_ref[...], preferred_element_type=jnp.float32) + b2_ref[...]
    out_ref[...] = o.astype(out_ref.dtype)


def _round_up(n, m):
    return ((n + m - 1) // m) * m


def constrained_rotate_fc_loc(x, w1, b1, w2, b2, *, tb=2048):
    """x: (B, indim) in its native dtype; w1: (32, indim); b1: (32,);
    w2: (2, 32); b2: (2,). Returns theta of shape (B, 2, 3), float32."""
    B, indim = x.shape
    hidden = w1.shape[0]

    # Fold theta assembly [[cos, sin, 0], [-sin, cos, 0]] into the second linear:
    #   flat = (h @ W2^T + b2) @ M = h @ (W2^T @ M) + (b2 @ M)
    M = jnp.array([[1.0, 0.0, 0.0, 0.0, 1.0, 0.0],
                   [0.0, 1.0, 0.0, -1.0, 0.0, 0.0]], dtype=jnp.float32)  # (2, 6)
    w1t = w1.T.astype(x.dtype)                      # (indim, 32) -- matches x dtype for MXU
    b1r = b1.astype(jnp.float32)[None, :]           # (1, 32)
    w2e = w2.astype(jnp.float32).T @ M              # (32, 6)
    b2e = (b2.astype(jnp.float32) @ M)[None, :]     # (1, 6)

    # Batch tile: large multiple of 8, but never (much) larger than B itself.
    TB = min(int(tb), _round_up(max(B, 1), 8))
    grid = (pl.cdiv(B, TB),)
    x_bytes = x.dtype.itemsize

    # VMEM budget: double-buffered x + out tiles, h intermediate, resident weights.
    tile_vmem = 2 * TB * indim * x_bytes + 2 * TB * 6 * 4 + TB * hidden * 4
    weight_vmem = indim * hidden * x_bytes + (hidden + hidden * 6 + 6) * 4
    vmem_limit = int(min(max(4 * (tile_vmem + weight_vmem), 8 << 20), 32 << 20))

    cost = pl.CostEstimate(
        flops=2 * B * (indim * hidden + hidden * 6),
        transcendentals=0,
        bytes_accessed=B * (indim * x_bytes + 6 * 4) + weight_vmem,
    )

    grid_spec = pltpu.PrefetchScalarGridSpec(
        num_scalar_prefetch=0,
        grid=grid,
        in_specs=[
            pl.BlockSpec((TB, indim), lambda i: (i, 0)),        # x tile (pipelined)
            pl.BlockSpec((indim, hidden), lambda i: (0, 0)),    # W1^T  (resident)
            pl.BlockSpec((1, hidden), lambda i: (0, 0)),        # b1    (resident)
            pl.BlockSpec((hidden, 6), lambda i: (0, 0)),        # W2e   (resident)
            pl.BlockSpec((1, 6), lambda i: (0, 0)),             # b2e   (resident)
        ],
        out_specs=pl.BlockSpec((TB, 6), lambda i: (i, 0)),
    )

    flat = pl.pallas_call(
        _fcloc_kernel,
        out_shape=jax.ShapeDtypeStruct((B, 6), jnp.float32),
        grid_spec=grid_spec,
        compiler_params=pltpu.CompilerParams(
            dimension_semantics=("parallel",),
            vmem_limit_bytes=vmem_limit,
        ),
        cost_estimate=cost,
    )(x, w1t, b1r, w2e, b2e)
    return flat.reshape(B, 2, 3)


def _reference(x, w1, b1, w2, b2):
    """Pure-JAX reference mirroring the PyTorch forward."""
    h = jnp.maximum(x.astype(jnp.float32) @ w1.T + b1, 0.0)
    o = h @ w2.T + b2                    # (B, 2)
    cos = o[:, 0:1]
    sin = o[:, 1:2]
    zero = jnp.zeros_like(cos)
    top = jnp.concatenate([cos, sin, zero], axis=-1)     # (B, 3)
    bot = jnp.concatenate([-sin, cos, zero], axis=-1)    # (B, 3)
    return jnp.stack([top, bot], axis=1)                 # (B, 2, 3)


if __name__ == "__main__":
    INDIM, HIDDEN, OUTDIM = 16, 32, 2

    key = jax.random.PRNGKey(0)
    kx1, kx2, kw1, kb1 = jax.random.split(key, 4)

    # Linear(indim, 32): PyTorch-style uniform(-1/sqrt(fan_in), 1/sqrt(fan_in)), deterministic.
    bound1 = 1.0 / (INDIM ** 0.5)
    w1 = jax.random.uniform(kw1, (HIDDEN, INDIM), minval=-bound1, maxval=bound1, dtype=jnp.float32)
    b1 = jax.random.uniform(kb1, (HIDDEN,), minval=-bound1, maxval=bound1, dtype=jnp.float32)

    # Linear(32, 2): as in __init__ -- weight filled with 0, bias = [1, 0].
    w2 = jnp.zeros((OUTDIM, HIDDEN), dtype=jnp.float32)
    b2 = jnp.array([1.0, 0.0], dtype=jnp.float32)

    # Test 1: small batch (B=4) -> single grid step with a partial block.
    x1 = jax.random.normal(kx1, (4, INDIM), dtype=jnp.float32)
    theta1 = jax.block_until_ready(constrained_rotate_fc_loc(x1, w1, b1, w2, b2))
    ref1 = _reference(x1, w1, b1, w2, b2)
    assert theta1.shape == (4, 2, 3), theta1.shape
    assert jnp.allclose(theta1, ref1, atol=1e-5, rtol=1e-5)

    # Test 2: multi-step grid with a remainder tile (B=300, TB=128 -> 3 steps).
    x2 = jax.random.normal(kx2, (300, INDIM), dtype=jnp.float32)
    theta2 = jax.block_until_ready(constrained_rotate_fc_loc(x2, w1, b1, w2, b2, tb=128))
    ref2 = _reference(x2, w1, b1, w2, b2)
    assert theta2.shape == (300, 2, 3), theta2.shape
    assert jnp.allclose(theta2, ref2, atol=1e-5, rtol=1e-5)

    # TODO(synk): set_parameter/get_parameter (host-side numpy bookkeeping of the last
    # batch element) has no device-kernel equivalent; it is intentionally omitted.
    print("KERNEL_OK")
</pallas_src>

<mosaic_0001>
module attributes {stable_mosaic.version = 11 : i64} {
  func.func @_fcloc_kernel(%arg0: i32, %arg1: memref<8x16xf32, #tpu.memory_space<vmem>>, %arg2: memref<16x32xf32, #tpu.memory_space<vmem>>, %arg3: memref<1x32xf32, #tpu.memory_space<vmem>>, %arg4: memref<32x6xf32, #tpu.memory_space<vmem>>, %arg5: memref<1x6xf32, #tpu.memory_space<vmem>>, %arg6: memref<8x6xf32, #tpu.memory_space<vmem>>) attributes {dimension_semantics = [#tpu.dimension_semantics<parallel>], iteration_bounds = array<i64: 1>, scalar_prefetch = 0 : i64, scratch_operands = 0 : i64, tpu.core_type = #tpu.core_type<tc>, window_params = [{transform_indices = @transform_0, window_bounds = array<i64: 8, 16>}, {pipeline_mode = #tpu.pipeline_mode<synchronous>, transform_indices = @transform_1, window_bounds = array<i64: 16, 32>}, {pipeline_mode = #tpu.pipeline_mode<synchronous>, transform_indices = @transform_2, window_bounds = array<i64: 1, 32>}, {pipeline_mode = #tpu.pipeline_mode<synchronous>, transform_indices = @transform_3, window_bounds = array<i64: 32, 6>}, {pipeline_mode = #tpu.pipeline_mode<synchronous>, transform_indices = @transform_4, window_bounds = array<i64: 1, 6>}, {transform_indices = @transform_5, window_bounds = array<i64: 8, 6>}]} {
    %c0 = arith.constant 0 : index
    %c0_0 = arith.constant 0 : index
    %0 = vector.load %arg1[%c0, %c0_0] : memref<8x16xf32, #tpu.memory_space<vmem>>, vector<8x16xf32>
    %c0_1 = arith.constant 0 : index
    %c0_2 = arith.constant 0 : index
    %1 = vector.load %arg2[%c0_1, %c0_2] : memref<16x32xf32, #tpu.memory_space<vmem>>, vector<16x32xf32>
    %cst = arith.constant dense<0.000000e+00> : vector<8x32xf32>
    %2 = tpu.matmul %0, %1, %cst {dimension_numbers = #tpu.dot_dimension_numbers<[1], [0], [0], [1], [0, 0, 1, 1], [], []>} : vector<8x16xf32>, vector<16x32xf32>, vector<8x32xf32> -> vector<8x32xf32>
    %c0_3 = arith.constant 0 : index
    %c0_4 = arith.constant 0 : index
    %3 = vector.load %arg3[%c0_3, %c0_4] : memref<1x32xf32, #tpu.memory_space<vmem>>, vector<1x32xf32>
    %4 = vector.broadcast %3 : vector<1x32xf32> to vector<8x32xf32>
    %5 = arith.addf %2, %4 : vector<8x32xf32>
    %cst_5 = arith.constant 0.000000e+00 : f32
    %6 = vector.broadcast %cst_5 : f32 to vector<8x32xf32>
    %7 = arith.maximumf %5, %6 : vector<8x32xf32>
    %c0_6 = arith.constant 0 : index
    %c0_7 = arith.constant 0 : index
    %8 = vector.load %arg4[%c0_6, %c0_7] : memref<32x6xf32, #tpu.memory_space<vmem>>, vector<32x6xf32>
    %cst_8 = arith.constant dense<0.000000e+00> : vector<8x6xf32>
    %9 = tpu.matmul %7, %8, %cst_8 {dimension_numbers = #tpu.dot_dimension_numbers<[1], [0], [0], [1], [0, 0, 1, 1], [], []>} : vector<8x32xf32>, vector<32x6xf32>, vector<8x6xf32> -> vector<8x6xf32>
    %c0_9 = arith.constant 0 : index
    %c0_10 = arith.constant 0 : index
    %10 = vector.load %arg5[%c0_9, %c0_10] : memref<1x6xf32, #tpu.memory_space<vmem>>, vector<1x6xf32>
    %11 = vector.broadcast %10 : vector<1x6xf32> to vector<8x6xf32>
    %12 = arith.addf %9, %11 : vector<8x6xf32>
    %c0_11 = arith.constant 0 : index
    %c0_12 = arith.constant 0 : index
    %13 = vector.load %arg6[%c0_11, %c0_12] : memref<8x6xf32, #tpu.memory_space<vmem>>, vector<8x6xf32>
    tpu.vector_store %arg6[%c0_11, %c0_12], %12 {strides = array<i32>} : memref<8x6xf32, #tpu.memory_space<vmem>>, vector<8x6xf32>,
    return
  }
  func.func @transform_0(%arg0: i32) -> (i32, i32) {
    %c0_i32 = arith.constant 0 : i32
    %c0_i32_0 = arith.constant 0 : i32
    return %arg0, %c0_i32 : i32, i32
  }
  func.func @transform_1(%arg0: i32) -> (i32, i32) {
    %c0_i32 = arith.constant 0 : i32
    %c0_i32_0 = arith.constant 0 : i32
    %c0_i32_1 = arith.constant 0 : i32
    return %c0_i32, %c0_i32_0 : i32, i32
  }
  func.func @transform_2(%arg0: i32) -> (i32, i32) {
    %c0_i32 = arith.constant 0 : i32
    %c0_i32_0 = arith.constant 0 : i32
    %c0_i32_1 = arith.constant 0 : i32
    return %c0_i32, %c0_i32_0 : i32, i32
  }
  func.func @transform_3(%arg0: i32) -> (i32, i32) {
    %c0_i32 = arith.constant 0 : i32
    %c0_i32_0 = arith.constant 0 : i32
    %c0_i32_1 = arith.constant 0 : i32
    return %c0_i32, %c0_i32_0 : i32, i32
  }
  func.func @transform_4(%arg0: i32) -> (i32, i32) {
    %c0_i32 = arith.constant 0 : i32
    %c0_i32_0 = arith.constant 0 : i32
    %c0_i32_1 = arith.constant 0 : i32
    return %c0_i32, %c0_i32_0 : i32, i32
  }
  func.func @transform_5(%arg0: i32) -> (i32, i32) {
    %c0_i32 = arith.constant 0 : i32
    %c0_i32_0 = arith.constant 0 : i32
    return %arg0, %c0_i32 : i32, i32
  }
}

</mosaic_0001>

<llo_original>
// kernel: tpu_custom_call.1
$region0: #{tpu_custom_call.1}
  #allocation0 [shape = 'u32[]', space=smem, size = 0x4, offset = 0x4, fixed_abs, tag = 'smem constant byte address 0x4 - core index']
  #allocation1 [shape = 'u32[144,128]{1,0:T(1,128)}', space=vmem, size = 0x12000, scoped, tag = 'internal scratch']
  %s0 = inlined_call_operand.vmem [shape: f32[4,16], index: 0, kind: input, shape index: {}]
  %s1 = inlined_call_operand.vmem [shape: f32[16,32], index: 1, kind: input, shape index: {}]
  %s2 = inlined_call_operand.vmem [shape: f32[1,32], index: 2, kind: input, shape index: {}]
  %s3 = inlined_call_operand.vmem [shape: f32[32,6], index: 3, kind: input, shape index: {}]
  %s4 = inlined_call_operand.vmem [shape: f32[1,6], index: 4, kind: input, shape index: {}]
  %s5 = inlined_call_operand.hbm [shape: f32[4,6], index: 5, kind: output, shape index: {}]
  %s6 = sld [smem:[#allocation0]]
  $region30: #{tpu_custom_call.1} parent=0
    _
  %s8 = ssub.s32 1, %s6
  %s9 = scalar_select 0, %s8, %s6
  $region1: #{tpu_custom_call.1} parent=0
    #allocation2 [shape = 'u8[4096]{0}', space=vmem, size = 0x1000, scoped, tag = 'output window, operand 0, single buffered']
    #allocation3 [shape = 's32[1]{0}', space=sflag, size = 0x4, scoped, tag = 'scoped memory for tpu_custom_call.1']
    %10 = vsyncpa [#allocation3], 0
    // Predicated region
    $region2: #{tpu_custom_call.1} parent=1 // pred_check
      _
    $region3: #{tpu_custom_call.1} parent=1 // pred_check_branch
      %12 = sbr.rel (0) target = $region5
    $region4: #{tpu_custom_call.1} parent=1 // pred_region
      _
    $region5: #{tpu_custom_call.1} parent=1 // pred_fallthru
      _
    // Predicated region
    $region6: #{tpu_custom_call.1} parent=1 // pred_check
      _
    $region7: #{tpu_custom_call.1} parent=1 // pred_check_branch
      %14 = sbr.rel (0) target = $region9
    $region8: #{tpu_custom_call.1} parent=1 // pred_region
      _
    $region9: #{tpu_custom_call.1} parent=1 // pred_fallthru
      _
    // Predicated region
    $region10: #{tpu_custom_call.1} parent=1 // pred_check
      _
    $region11: #{tpu_custom_call.1} parent=1 // pred_check_branch
      %16 = sbr.rel (0) target = $region13
    $region12: #{tpu_custom_call.1} parent=1 // pred_region
      _
    $region13: #{tpu_custom_call.1} parent=1 // pred_fallthru
      _
    // Predicated region
    $region14: #{tpu_custom_call.1} parent=1 // pred_check
      _
    $region15: #{tpu_custom_call.1} parent=1 // pred_check_branch
      %18 = sbr.rel (0) target = $region17
    $region16: #{tpu_custom_call.1} parent=1 // pred_region
      _
    $region17: #{tpu_custom_call.1} parent=1 // pred_fallthru
      _
    // Predicated region
    $region18: #{tpu_custom_call.1} parent=1 // pred_check
      _
    $region19: #{tpu_custom_call.1} parent=1 // pred_check_branch
      %20 = sbr.rel (0) target = $region21
    $region20: #{tpu_custom_call.1} parent=1 // pred_region
      _
    $region21: #{tpu_custom_call.1} parent=1 // pred_fallthru
      _
    %v21 = vld [vmem:[%s0] sm:$0xff]
    %v22 = vld [vmem:[%s1] sm:$0xff]
    %v23 = vld [vmem:[%s1 + $0x8] sm:$0xff]
    %v24 = vld [vmem:[%s2] sm:$0x1]
    %v26 = vlaneseq
    %v27 = vshrl.u32 %v26, 7
    %v28 = vsub.s32 0, %v27
    %v29 = vrot.slane %v24, %v28
    %vm31 = vcmask 130048
    %v33 = vsel %vm31, %v21, 0
    %35 = vmatprep.subr.mxu0 0.0
    %36 = vmatpush1.msra.mxu0 %v22
    %37 = vmatprep.subr.mxu0 0.0
    %38 = vmatpush1.msra.mxu0 %v23
    %39 = vmatprep.subr.mxu0 0.0
    %40 = vmatpush1.msra.mxu0 0.0
    %41 = vmatprep.subr.mxu0 0.0
    %42 = vmatpush1.msra.mxu0 0.0
    %43 = vmatprep.subr.mxu0 0.0
    %44 = vmatpush1.msra.mxu0 0.0
    %45 = vmatprep.subr.mxu0 0.0
    %46 = vmatpush1.msra.mxu0 0.0
    %47 = vmatprep.subr.mxu0 0.0
    %48 = vmatpush1.msra.mxu0 0.0
    %49 = vmatprep.subr.mxu0 0.0
    %50 = vmatpush1.msra.mxu0 0.0
    %51 = vmatprep.subr.mxu0 0.0
    %52 = vmatpush1.msra.mxu0 0.0
    %53 = vmatprep.subr.mxu0 0.0
    %54 = vmatpush1.msra.mxu0 0.0
    %55 = vmatprep.subr.mxu0 0.0
    %56 = vmatpush1.msra.mxu0 0.0
    %57 = vmatprep.subr.mxu0 0.0
    %58 = vmatpush1.msra.mxu0 0.0
    %59 = vmatprep.subr.mxu0 0.0
    %60 = vmatpush1.msra.mxu0 0.0
    %61 = vmatprep.subr.mxu0 0.0
    %62 = vmatpush1.msra.mxu0 0.0
    %63 = vmatprep.subr.mxu0 0.0
    %64 = vmatpush1.msra.mxu0 0.0
    %65 = vmatprep.subr.mxu0 0.0
    %66 = vmatpush1.msra.mxu0 0.0
    %67 = vmatprep.subr.mxu0 0.0
    %68 = vmatpush1.msra.mxu0 0.0
    %69 = vmatprep.subr.mxu0 0.0
    %70 = vmatpush1.msra.mxu0 0.0
    %71 = vmatprep.subr.mxu0 0.0
    %72 = vmatpush1.msra.mxu0 0.0
    %73 = vmatprep.subr.mxu0 0.0
    %74 = vmatpush1.msra.mxu0 0.0
    %75 = vmatprep.subr.mxu0 0.0
    %76 = vmatpush1.msra.mxu0 0.0
    %77 = vmatprep.subr.mxu0 0.0
    %78 = vmatpush1.msra.mxu0 0.0
    %79 = vmatprep.subr.mxu0 0.0
    %80 = vmatpush1.msra.mxu0 0.0
    %81 = vmatprep.subr.mxu0 0.0
    %82 = vmatpush1.msra.mxu0 0.0
    %83 = vmatprep.subr.mxu0 0.0
    %84 = vmatpush1.msra.mxu0 0.0
    %85 = vmatprep.subr.mxu0 0.0
    %86 = vmatpush1.msra.mxu0 0.0
    %87 = vmatprep.subr.mxu0 0.0
    %88 = vmatpush1.msra.mxu0 0.0
    %89 = vmatprep.subr.mxu0 0.0
    %90 = vmatpush1.msra.mxu0 0.0
    %91 = vmatprep.subr.mxu0 0.0
    %92 = vmatpush1.msra.mxu0 0.0
    %93 = vmatprep.subr.mxu0 0.0
    %94 = vmatpush1.msra.mxu0 0.0
    %95 = vmatprep.subr.mxu0 0.0
    %96 = vmatpush1.msra.mxu0 0.0
    %97 = vmatprep.subr.mxu0 0.0
    %98 = vmatpush1.msra.mxu0 0.0
    %99 = vmatprep.mubr.f32.mxu0 0.0
    %100 = vmatmul.mubr.f32.gmra.mrb[0].mxu0 %v33
    %v101 = vpop.f32.mrb[0].mxu0
    %v102 = vadd.f32 %v29, %v101
    %v103 = vpop.f32.mrb[0].mxu0
    %104 = vdwg.mxu0
    %v105 = vmax.f32 %v102, 0.0
    %v106 = vld [vmem:[%s3] sm:$0xff]
    %v107 = vld [vmem:[%s3 + $0x8] sm:$0xff]
    %v108 = vld [vmem:[%s3 + $0x10] sm:$0xff]
    %v109 = vld [vmem:[%s3 + $0x18] sm:$0xff]
    %v110 = vld [vmem:[%s4] sm:$0x1]
    %v112 = vlaneseq
    %v113 = vshrl.u32 %v112, 7
    %v114 = vsub.s32 0, %v113
    %v115 = vrot.slane %v110, %v114
    %vm117 = vcmask 261120
    %v119 = vsel %vm117, %v105, 0
    %121 = vmatprep.subr.mxu0 0.0
    %122 = vmatpush1.msra.mxu0 %v106
    %123 = vmatprep.subr.mxu0 0.0
    %124 = vmatpush1.msra.mxu0 %v107
    %125 = vmatprep.subr.mxu0 0.0
    %126 = vmatpush1.msra.mxu0 %v108
    %127 = vmatprep.subr.mxu0 0.0
    %128 = vmatpush1.msra.mxu0 %v109
    %129 = vmatprep.subr.mxu0 0.0
    %130 = vmatpush1.msra.mxu0 0.0
    %131 = vmatprep.subr.mxu0 0.0
    %132 = vmatpush1.msra.mxu0 0.0
    %133 = vmatprep.subr.mxu0 0.0
    %134 = vmatpush1.msra.mxu0 0.0
    %135 = vmatprep.subr.mxu0 0.0
    %136 = vmatpush1.msra.mxu0 0.0
    %137 = vmatprep.subr.mxu0 0.0
    %138 = vmatpush1.msra.mxu0 0.0
    %139 = vmatprep.subr.mxu0 0.0
    %140 = vmatpush1.msra.mxu0 0.0
    %141 = vmatprep.subr.mxu0 0.0
    %142 = vmatpush1.msra.mxu0 0.0
    %143 = vmatprep.subr.mxu0 0.0
    %144 = vmatpush1.msra.mxu0 0.0
    %145 = vmatprep.subr.mxu0 0.0
    %146 = vmatpush1.msra.mxu0 0.0
    %147 = vmatprep.subr.mxu0 0.0
    %148 = vmatpush1.msra.mxu0 0.0
    %149 = vmatprep.subr.mxu0 0.0
    %150 = vmatpush1.msra.mxu0 0.0
    %151 = vmatprep.subr.mxu0 0.0
    %152 = vmatpush1.msra.mxu0 0.0
    %153 = vmatprep.subr.mxu0 0.0
    %154 = vmatpush1.msra.mxu0 0.0
    %155 = vmatprep.subr.mxu0 0.0
    %156 = vmatpush1.msra.mxu0 0.0
    %157 = vmatprep.subr.mxu0 0.0
    %158 = vmatpush1.msra.mxu0 0.0
    %159 = vmatprep.subr.mxu0 0.0
    %160 = vmatpush1.msra.mxu0 0.0
    %161 = vmatprep.subr.mxu0 0.0
    %162 = vmatpush1.msra.mxu0 0.0
    %163 = vmatprep.subr.mxu0 0.0
    %164 = vmatpush1.msra.mxu0 0.0
    %165 = vmatprep.subr.mxu0 0.0
    %166 = vmatpush1.msra.mxu0 0.0
    %167 = vmatprep.subr.mxu0 0.0
    %168 = vmatpush1.msra.mxu0 0.0
    %169 = vmatprep.subr.mxu0 0.0
    %170 = vmatpush1.msra.mxu0 0.0
    %171 = vmatprep.subr.mxu0 0.0
    %172 = vmatpush1.msra.mxu0 0.0
    %173 = vmatprep.subr.mxu0 0.0
    %174 = vmatpush1.msra.mxu0 0.0
    %175 = vmatprep.subr.mxu0 0.0
    %176 = vmatpush1.msra.mxu0 0.0
    %177 = vmatprep.subr.mxu0 0.0
    %178 = vmatpush1.msra.mxu0 0.0
    %179 = vmatprep.subr.mxu0 0.0
    %180 = vmatpush1.msra.mxu0 0.0
    %181 = vmatprep.subr.mxu0 0.0
    %182 = vmatpush1.msra.mxu0 0.0
    %183 = vmatprep.subr.mxu0 0.0
    %184 = vmatpush1.msra.mxu0 0.0
    %185 = vmatprep.mubr.f32.mxu0 0.0
    %186 = vmatmul.mubr.f32.gmra.mrb[0].mxu0 %v119
    %v187 = vpop.f32.mrb[0].mxu0
    %v188 = vadd.f32 %v115, %v187
    %v189 = vpop.f32.mrb[0].mxu0
    %190 = vdwg.mxu0
    %vm191 = vcmask 48128
    %192 = vst.msk [vmem:[#allocation2] sm:$0xff] %vm191, %v188
    // Predicated region
    $region22: #{tpu_custom_call.1} parent=1 // pred_check
      _
    $region23: #{tpu_custom_call.1} parent=1 // pred_check_branch
      %194 = sbr.rel (0) target = $region25
    $region24: #{tpu_custom_call.1} parent=1 // pred_region
      %s196 = ssub.s32 128, 64
      %197 = vsyncadd [#allocation3], %s196
      %s198 = sshll.u32 [#allocation2], 4
      %s199 = int_to_ptr.vmem [resolvable:$true] %s198
      %204 = dma.vmem_to_hbm [thread:$0]  %s199, 64, %s5, [#allocation3], 64, 64, 4
    $region25: #{tpu_custom_call.1} parent=1 // pred_fallthru
      _
    // Predicated region
    $region26: #{tpu_custom_call.1} parent=1 // pred_check
      _
    $region27: #{tpu_custom_call.1} parent=1 // pred_check_branch
      %206 = sbr.rel (0) target = $region29
    $region28: #{tpu_custom_call.1} parent=1 // pred_region
      %207 = dma.done [#allocation3], 128
    $region29: #{tpu_custom_call.1} parent=1 // pred_fallthru
      _
    %208 = vsyncpa [#allocation3], 1

</llo_original>
